<compile_context>
chip_gen: v7x
topology: tpu7x:2x2x1
jax: 0.10.0
libtpu: 0.0.40
codegen_flags: <defaults>
</compile_context>

<pallas_src>
import jax
import jax.numpy as jnp
from jax.experimental import pallas as pl
from jax.experimental.pallas import tpu as pltpu

_LANE = 128
_SUBLANE = 8


def _round_up(n, m):
    return ((n + m - 1) // m) * m


def _mlp_kernel(x_ref, w1_ref, b1_ref, w2_ref, b2_ref, o_ref):
    # Fused two-layer MLP: matmul -> bias -> relu -> matmul -> bias -> relu.
    x = x_ref[...]
    h = jnp.dot(x, w1_ref[...], preferred_element_type=jnp.float32)
    h = jnp.maximum(h + b1_ref[...], 0.0)                 # bias + ReLU in f32
    y = jnp.dot(h.astype(w2_ref.dtype), w2_ref[...],
                preferred_element_type=jnp.float32)
    o_ref[...] = jnp.maximum(y + b2_ref[...], 0.0).astype(o_ref.dtype)


def _resident_spec(shape):
    """Constant-index-map BlockSpec, single-buffered when supported."""
    index_map = lambda i: (0,) * len(shape)
    try:
        return pl.BlockSpec(shape, index_map, pipeline_mode=pl.Buffered(1))
    except TypeError:  # older jax without pipeline_mode kwarg
        return pl.BlockSpec(shape, index_map)


def _vmem_cap_bytes():
    try:
        return int(pltpu.get_tpu_info().vmem_capacity_bytes * 7 // 8)
    except Exception:
        return 100 * 1024 * 1024


def historical_team_success_forward(x, w1, b1, w2, b2, *, block_b=None,
                                    compute_dtype=None):
    """x: (B, input_dim); w1: (input_dim, H); b1: (H,)/(1, H); w2: (H, H); b2: (H,)/(1, H).

    Weights are stored pre-transposed relative to nn.Linear, i.e. (in, out).
    compute_dtype=None (default) keeps full f32 (exact PyTorch numerics);
    pass jnp.bfloat16 for MXU-native bf16 compute with f32 accumulation.
    """
    B, input_dim = x.shape
    k_in, H = w1.shape
    assert k_in == input_dim and w2.shape == (H, H)

    out_dtype = x.dtype
    cdt = x.dtype if compute_dtype is None else compute_dtype
    cdt_bytes = jnp.dtype(cdt).itemsize
    out_bytes = jnp.dtype(out_dtype).itemsize

    b1 = jnp.reshape(b1, (1, H)).astype(jnp.float32)
    b2 = jnp.reshape(b2, (1, H)).astype(jnp.float32)

    # Hidden-dim (output-lane) padding only; contraction dim stays unpadded.
    lane_aligned = (H % _LANE == 0)
    hp = H if lane_aligned else _round_up(H, _LANE)

    x_c = x.astype(cdt)
    if lane_aligned:
        # Fast path: no padding, no trailing slice.
        w1_p = w1.astype(cdt)
        w2_p = w2.astype(cdt)
        b1_p, b2_p = b1, b2
    else:
        # Zero padding is exact: padded rows/cols contribute 0 through both
        # matmuls, bias pads are 0, relu(0)=0; padded lanes sliced off below.
        pad_h = hp - H
        w1_p = jnp.pad(w1.astype(cdt), ((0, 0), (0, pad_h)))
        w2_p = jnp.pad(w2.astype(cdt), ((0, pad_h), (0, pad_h)))
        b1_p = jnp.pad(b1, ((0, 0), (0, pad_h)))
        b2_p = jnp.pad(b2, ((0, 0), (0, pad_h)))

    # Row (sublane) alignment matches the compute dtype's packing.
    row_align = 16 if cdt_bytes == 2 else (32 if cdt_bytes == 1 else _SUBLANE)

    if block_b is None:
        if B <= row_align:
            block_b = B                       # block == full batch dim
        else:
            # Aim for >= 4 grid steps (>= 2 per TensorCore on v7x) so the
            # activation DMA / output writeback overlap with compute.
            target = max(row_align, pl.cdiv(B, 4))
            block_b = min(512, _round_up(target, row_align))
            if hp >= 2048:                    # keep fused f32 intermediate small
                block_b = min(block_b, 256)

    grid = (pl.cdiv(B, block_b),)

    # Footprint-derived VMEM limit (x/out tiles double-buffered, weights single).
    footprint = (
        2 * block_b * input_dim * cdt_bytes          # x tile
        + input_dim * hp * cdt_bytes                 # W1 (Buffered(1))
        + hp * hp * cdt_bytes                        # W2 (Buffered(1))
        + 2 * hp * 4                                 # biases (f32)
        + 2 * block_b * hp * out_bytes               # out tile
        + block_b * hp * (4 + cdt_bytes)             # fused h (f32 acc + cast copy)
    )
    vmem_limit = int(min(max(int(footprint * 1.5), 32 * 1024 * 1024),
                         _vmem_cap_bytes()))

    out_p = pl.pallas_call(
        _mlp_kernel,
        out_shape=jax.ShapeDtypeStruct((B, hp), out_dtype),
        grid_spec=pltpu.PrefetchScalarGridSpec(
            num_scalar_prefetch=0,
            grid=grid,
            in_specs=[
                pl.BlockSpec((block_b, input_dim), lambda i: (i, 0)),  # x tile
                _resident_spec((input_dim, hp)),                       # W1
                _resident_spec((1, hp)),                               # b1
                _resident_spec((hp, hp)),                              # W2
                _resident_spec((1, hp)),                               # b2
            ],
            out_specs=pl.BlockSpec((block_b, hp), lambda i: (i, 0)),
        ),
        compiler_params=pltpu.CompilerParams(
            dimension_semantics=("parallel",),
            vmem_limit_bytes=vmem_limit,
        ),
    )(x_c, w1_p, b1_p, w2_p, b2_p)

    if lane_aligned:
        return out_p
    return out_p[:, :H]


def reference_forward(x, w1, b1, w2, b2, compute_dtype=None):
    """Pure-JAX reference mirroring the kernel's dtype handling."""
    if compute_dtype is not None:
        x = x.astype(compute_dtype)
        w1 = w1.astype(compute_dtype)
        w2 = w2.astype(compute_dtype)
    b1 = jnp.reshape(b1, (1, -1)).astype(jnp.float32)
    b2 = jnp.reshape(b2, (1, -1)).astype(jnp.float32)
    h = jnp.dot(x, w1, preferred_element_type=jnp.float32) + b1
    h = jnp.maximum(h, 0.0)
    y = jnp.dot(h.astype(w2.dtype), w2, preferred_element_type=jnp.float32) + b2
    return jnp.maximum(y, 0.0)


if __name__ == "__main__":
    key = jax.random.PRNGKey(0)
    batch, input_dim, hidden_dim = 8, 16, 32

    k_x, k_w1, k_b1, k_w2, k_b2 = jax.random.split(key, 5)

    # Deterministic parameter init (mimicking nn.Linear uniform ranges).
    x = jax.random.normal(k_x, (batch, input_dim), dtype=jnp.float32)
    lim1 = 1.0 / (input_dim ** 0.5)
    w1 = jax.random.uniform(k_w1, (input_dim, hidden_dim), jnp.float32, -lim1, lim1)
    b1 = jax.random.uniform(k_b1, (1, hidden_dim), jnp.float32, -lim1, lim1)
    lim2 = 1.0 / (hidden_dim ** 0.5)
    w2 = jax.random.uniform(k_w2, (hidden_dim, hidden_dim), jnp.float32, -lim2, lim2)
    b2 = jax.random.uniform(k_b2, (1, hidden_dim), jnp.float32, -lim2, lim2)

    # Full-f32 path (default): exact match to the PyTorch module's numerics.
    out_f32 = historical_team_success_forward(x, w1, b1, w2, b2)
    out_f32 = jax.block_until_ready(out_f32)
    ref_f32 = reference_forward(x, w1, b1, w2, b2)
    assert out_f32.shape == (batch, hidden_dim)
    assert out_f32.dtype == x.dtype
    assert jnp.allclose(out_f32, ref_f32, atol=1e-5, rtol=1e-5), "f32 mismatch"

    # Opt-in bf16 MXU-compute path (f32 accumulation + f32 epilogue).
    out_bf16 = historical_team_success_forward(x, w1, b1, w2, b2,
                                               compute_dtype=jnp.bfloat16)
    out_bf16 = jax.block_until_ready(out_bf16)
    ref_bf16 = reference_forward(x, w1, b1, w2, b2, compute_dtype=jnp.bfloat16)
    assert jnp.allclose(out_bf16, ref_bf16, atol=1e-4, rtol=1e-4), "bf16 mismatch"

    print("KERNEL_OK")
</pallas_src>

<mosaic_0001>
module attributes {stable_mosaic.version = 11 : i64} {
  func.func @_mlp_kernel(%arg0: i32, %arg1: memref<8x16xf32, #tpu.memory_space<vmem>>, %arg2: memref<16x128xf32, #tpu.memory_space<vmem>>, %arg3: memref<1x128xf32, #tpu.memory_space<vmem>>, %arg4: memref<128x128xf32, #tpu.memory_space<vmem>>, %arg5: memref<1x128xf32, #tpu.memory_space<vmem>>, %arg6: memref<8x128xf32, #tpu.memory_space<vmem>>) attributes {dimension_semantics = [#tpu.dimension_semantics<parallel>], iteration_bounds = array<i64: 1>, scalar_prefetch = 0 : i64, scratch_operands = 0 : i64, tpu.core_type = #tpu.core_type<tc>, window_params = [{transform_indices = @transform_0, window_bounds = array<i64: 8, 16>}, {pipeline_mode = #tpu.pipeline_mode<synchronous>, transform_indices = @transform_1, window_bounds = array<i64: 16, 128>}, {pipeline_mode = #tpu.pipeline_mode<synchronous>, transform_indices = @transform_2, window_bounds = array<i64: 1, 128>}, {pipeline_mode = #tpu.pipeline_mode<synchronous>, transform_indices = @transform_3, window_bounds = array<i64: 128, 128>}, {pipeline_mode = #tpu.pipeline_mode<synchronous>, transform_indices = @transform_4, window_bounds = array<i64: 1, 128>}, {transform_indices = @transform_5, window_bounds = array<i64: 8, 128>}]} {
    %c0 = arith.constant 0 : index
    %c0_0 = arith.constant 0 : index
    %0 = vector.load %arg1[%c0, %c0_0] : memref<8x16xf32, #tpu.memory_space<vmem>>, vector<8x16xf32>
    %c0_1 = arith.constant 0 : index
    %c0_2 = arith.constant 0 : index
    %1 = vector.load %arg2[%c0_1, %c0_2] : memref<16x128xf32, #tpu.memory_space<vmem>>, vector<16x128xf32>
    %cst = arith.constant dense<0.000000e+00> : vector<8x128xf32>
    %2 = tpu.matmul %0, %1, %cst {dimension_numbers = #tpu.dot_dimension_numbers<[1], [0], [0], [1], [0, 0, 1, 1], [], []>} : vector<8x16xf32>, vector<16x128xf32>, vector<8x128xf32> -> vector<8x128xf32>
    %c0_3 = arith.constant 0 : index
    %c0_4 = arith.constant 0 : index
    %3 = vector.load %arg3[%c0_3, %c0_4] : memref<1x128xf32, #tpu.memory_space<vmem>>, vector<1x128xf32>
    %4 = vector.broadcast %3 : vector<1x128xf32> to vector<8x128xf32>
    %5 = arith.addf %2, %4 : vector<8x128xf32>
    %cst_5 = arith.constant 0.000000e+00 : f32
    %6 = vector.broadcast %cst_5 : f32 to vector<8x128xf32>
    %7 = arith.maximumf %5, %6 : vector<8x128xf32>
    %c0_6 = arith.constant 0 : index
    %c0_7 = arith.constant 0 : index
    %8 = vector.load %arg4[%c0_6, %c0_7] : memref<128x128xf32, #tpu.memory_space<vmem>>, vector<128x128xf32>
    %cst_8 = arith.constant dense<0.000000e+00> : vector<8x128xf32>
    %9 = tpu.matmul %7, %8, %cst_8 {dimension_numbers = #tpu.dot_dimension_numbers<[1], [0], [0], [1], [0, 0, 1, 1], [], []>} : vector<8x128xf32>, vector<128x128xf32>, vector<8x128xf32> -> vector<8x128xf32>
    %c0_9 = arith.constant 0 : index
    %c0_10 = arith.constant 0 : index
    %10 = vector.load %arg5[%c0_9, %c0_10] : memref<1x128xf32, #tpu.memory_space<vmem>>, vector<1x128xf32>
    %11 = vector.broadcast %10 : vector<1x128xf32> to vector<8x128xf32>
    %12 = arith.addf %9, %11 : vector<8x128xf32>
    %cst_11 = arith.constant 0.000000e+00 : f32
    %13 = vector.broadcast %cst_11 : f32 to vector<8x128xf32>
    %14 = arith.maximumf %12, %13 : vector<8x128xf32>
    %c0_12 = arith.constant 0 : index
    %c0_13 = arith.constant 0 : index
    %15 = vector.load %arg6[%c0_12, %c0_13] : memref<8x128xf32, #tpu.memory_space<vmem>>, vector<8x128xf32>
    tpu.vector_store %arg6[%c0_12, %c0_13], %14 {strides = array<i32>} : memref<8x128xf32, #tpu.memory_space<vmem>>, vector<8x128xf32>,
    return
  }
  func.func @transform_0(%arg0: i32) -> (i32, i32) {
    %c0_i32 = arith.constant 0 : i32
    %c0_i32_0 = arith.constant 0 : i32
    return %arg0, %c0_i32 : i32, i32
  }
  func.func @transform_1(%arg0: i32) -> (i32, i32) {
    %c0_i32 = arith.constant 0 : i32
    %c0_i32_0 = arith.constant 0 : i32
    %c0_i32_1 = arith.constant 0 : i32
    return %c0_i32, %c0_i32_0 : i32, i32
  }
  func.func @transform_2(%arg0: i32) -> (i32, i32) {
    %c0_i32 = arith.constant 0 : i32
    %c0_i32_0 = arith.constant 0 : i32
    %c0_i32_1 = arith.constant 0 : i32
    return %c0_i32, %c0_i32_0 : i32, i32
  }
  func.func @transform_3(%arg0: i32) -> (i32, i32) {
    %c0_i32 = arith.constant 0 : i32
    %c0_i32_0 = arith.constant 0 : i32
    %c0_i32_1 = arith.constant 0 : i32
    return %c0_i32, %c0_i32_0 : i32, i32
  }
  func.func @transform_4(%arg0: i32) -> (i32, i32) {
    %c0_i32 = arith.constant 0 : i32
    %c0_i32_0 = arith.constant 0 : i32
    %c0_i32_1 = arith.constant 0 : i32
    return %c0_i32, %c0_i32_0 : i32, i32
  }
  func.func @transform_5(%arg0: i32) -> (i32, i32) {
    %c0_i32 = arith.constant 0 : i32
    %c0_i32_0 = arith.constant 0 : i32
    return %arg0, %c0_i32 : i32, i32
  }
}

</mosaic_0001>

<llo_original>
// kernel: tpu_custom_call.1
$region0: #{tpu_custom_call.1}
  #allocation0 [shape = 'u32[]', space=smem, size = 0x4, offset = 0x4, fixed_abs, tag = 'smem constant byte address 0x4 - core index']
  #allocation1 [shape = 'u32[144,128]{1,0:T(1,128)}', space=vmem, size = 0x12000, scoped, tag = 'internal scratch']
  %s0 = inlined_call_operand.hbm [shape: f32[8,16], index: 0, kind: input, shape index: {}]
  %s1 = inlined_call_operand.hbm [shape: f32[16,128], index: 1, kind: input, shape index: {}]
  %s2 = inlined_call_operand.vmem [shape: f32[1,128], index: 2, kind: input, shape index: {}]
  %s3 = inlined_call_operand.hbm [shape: f32[128,128], index: 3, kind: input, shape index: {}]
  %s4 = inlined_call_operand.vmem [shape: f32[1,128], index: 4, kind: input, shape index: {}]
  %s5 = inlined_call_operand.hbm [shape: f32[8,128], index: 5, kind: output, shape index: {}]
  %s6 = sld [smem:[#allocation0]]
  $region42: #{tpu_custom_call.1} parent=0
    _
  %s8 = ssub.s32 1, %s6
  %s9 = scalar_select 0, %s8, %s6
  $region1: #{tpu_custom_call.1} parent=0
    #allocation2 [shape = 'u8[4096]{0}', space=vmem, size = 0x1000, scoped, tag = 'input window, operand 0, single buffered']
    #allocation3 [shape = 's32[1]{0}', space=sflag, size = 0x4, scoped, tag = 'scoped memory for tpu_custom_call.1']
    #allocation4 [shape = 's32[1]{0}', space=sflag, size = 0x4, scoped, tag = 'scoped memory for tpu_custom_call.1']
    #allocation5 [shape = 'u8[8192]{0}', space=vmem, size = 0x2000, scoped, tag = 'input window, operand 1, single buffered']
    #allocation6 [shape = 's32[1]{0}', space=sflag, size = 0x4, scoped, tag = 'scoped memory for tpu_custom_call.1']
    #allocation7 [shape = 'u8[65536]{0}', space=vmem, size = 0x10000, scoped, tag = 'input window, operand 3, single buffered']
    #allocation8 [shape = 'u8[4096]{0}', space=vmem, size = 0x1000, scoped, tag = 'output window, operand 0, single buffered']
    %10 = vsyncpa [#allocation3], 0
    %11 = vsyncpa [#allocation6], 0
    %12 = vsyncpa [#allocation4], 0
    // Predicated region
    $region2: #{tpu_custom_call.1} parent=1 // pred_check
      _
    $region3: #{tpu_custom_call.1} parent=1 // pred_check_branch
      %14 = sbr.rel (0) target = $region5
    $region4: #{tpu_custom_call.1} parent=1 // pred_region
      %s16 = ssub.s32 128, 128
      %17 = vsyncadd [#allocation3], %s16
      %s19 = sshll.u32 [#allocation2], 4
      %s20 = int_to_ptr.vmem [resolvable:$true] %s19
      %22 = dma.hbm_to_vmem [thread:$0]  %s0, 128, %s20, [#allocation3]
    $region5: #{tpu_custom_call.1} parent=1 // pred_fallthru
      _
    // Predicated region
    $region6: #{tpu_custom_call.1} parent=1 // pred_check
      _
    $region7: #{tpu_custom_call.1} parent=1 // pred_check_branch
      %24 = sbr.rel (0) target = $region9
    $region8: #{tpu_custom_call.1} parent=1 // pred_region
      %s26 = ssub.s32 256, 256
      %27 = vsyncadd [#allocation6], %s26
      %s28 = sshll.u32 [#allocation5], 4
      %s29 = int_to_ptr.vmem [resolvable:$true] %s28
      %34 = dma.hbm_to_vmem [thread:$0]  %s1, 256, %s29, [#allocation6], 128, 128, 8
    $region9: #{tpu_custom_call.1} parent=1 // pred_fallthru
      _
    // Predicated region
    $region10: #{tpu_custom_call.1} parent=1 // pred_check
      _
    $region11: #{tpu_custom_call.1} parent=1 // pred_check_branch
      %36 = sbr.rel (0) target = $region13
    $region12: #{tpu_custom_call.1} parent=1 // pred_region
      _
    $region13: #{tpu_custom_call.1} parent=1 // pred_fallthru
      _
    // Predicated region
    $region14: #{tpu_custom_call.1} parent=1 // pred_check
      _
    $region15: #{tpu_custom_call.1} parent=1 // pred_check_branch
      %38 = sbr.rel (0) target = $region17
    $region16: #{tpu_custom_call.1} parent=1 // pred_region
      %s40 = ssub.s32 2048, 2048
      %41 = vsyncadd [#allocation6], %s40
      %s42 = sshll.u32 [#allocation7], 4
      %s43 = int_to_ptr.vmem [resolvable:$true] %s42
      %48 = dma.hbm_to_vmem [thread:$0]  %s3, 2048, %s43, [#allocation6], 128, 128, 8
    $region17: #{tpu_custom_call.1} parent=1 // pred_fallthru
      _
    // Predicated region
    $region18: #{tpu_custom_call.1} parent=1 // pred_check
      _
    $region19: #{tpu_custom_call.1} parent=1 // pred_check_branch
      %50 = sbr.rel (0) target = $region21
    $region20: #{tpu_custom_call.1} parent=1 // pred_region
      _
    $region21: #{tpu_custom_call.1} parent=1 // pred_fallthru
      _
    // Predicated region
    $region22: #{tpu_custom_call.1} parent=1 // pred_check
      _
    $region23: #{tpu_custom_call.1} parent=1 // pred_check_branch
      %52 = sbr.rel (0) target = $region25
    $region24: #{tpu_custom_call.1} parent=1 // pred_region
      %53 = dma.done [#allocation3], 128
    $region25: #{tpu_custom_call.1} parent=1 // pred_fallthru
      _
    // Predicated region
    $region26: #{tpu_custom_call.1} parent=1 // pred_check
      _
    $region27: #{tpu_custom_call.1} parent=1 // pred_check_branch
      %55 = sbr.rel (0) target = $region29
    $region28: #{tpu_custom_call.1} parent=1 // pred_region
      %56 = dma.done [#allocation6], 256
    $region29: #{tpu_custom_call.1} parent=1 // pred_fallthru
      _
    // Predicated region
    $region30: #{tpu_custom_call.1} parent=1 // pred_check
      _
    $region31: #{tpu_custom_call.1} parent=1 // pred_check_branch
      %58 = sbr.rel (0) target = $region33
    $region32: #{tpu_custom_call.1} parent=1 // pred_region
      %59 = dma.done [#allocation6], 2048
    $region33: #{tpu_custom_call.1} parent=1 // pred_fallthru
      _
    %v60 = vld [vmem:[#allocation2] sm:$0xff]
    %v61 = vld [vmem:[#allocation5] sm:$0xff]
    %v62 = vld [vmem:[#allocation5 + $0x8] sm:$0xff]
    %v63 = vld [vmem:[%s2] sm:$0x1]
    %v65 = vlaneseq
    %v66 = vshrl.u32 %v65, 7
    %v67 = vsub.s32 0, %v66
    %v68 = vrot.slane %v63, %v67
    %vm70 = vcmask 130048
    %v72 = vsel %vm70, %v60, 0
    %74 = vmatprep.subr.mxu0 0.0
    %75 = vmatpush1.msra.mxu0 %v61
    %76 = vmatprep.subr.mxu0 0.0
    %77 = vmatpush1.msra.mxu0 %v62
    %78 = vmatprep.subr.mxu0 0.0
    %79 = vmatpush1.msra.mxu0 0.0
    %80 = vmatprep.subr.mxu0 0.0
    %81 = vmatpush1.msra.mxu0 0.0
    %82 = vmatprep.subr.mxu0 0.0
    %83 = vmatpush1.msra.mxu0 0.0
    %84 = vmatprep.subr.mxu0 0.0
    %85 = vmatpush1.msra.mxu0 0.0
    %86 = vmatprep.subr.mxu0 0.0
    %87 = vmatpush1.msra.mxu0 0.0
    %88 = vmatprep.subr.mxu0 0.0
    %89 = vmatpush1.msra.mxu0 0.0
    %90 = vmatprep.subr.mxu0 0.0
    %91 = vmatpush1.msra.mxu0 0.0
    %92 = vmatprep.subr.mxu0 0.0
    %93 = vmatpush1.msra.mxu0 0.0
    %94 = vmatprep.subr.mxu0 0.0
    %95 = vmatpush1.msra.mxu0 0.0
    %96 = vmatprep.subr.mxu0 0.0
    %97 = vmatpush1.msra.mxu0 0.0
    %98 = vmatprep.subr.mxu0 0.0
    %99 = vmatpush1.msra.mxu0 0.0
    %100 = vmatprep.subr.mxu0 0.0
    %101 = vmatpush1.msra.mxu0 0.0
    %102 = vmatprep.subr.mxu0 0.0
    %103 = vmatpush1.msra.mxu0 0.0
    %104 = vmatprep.subr.mxu0 0.0
    %105 = vmatpush1.msra.mxu0 0.0
    %106 = vmatprep.subr.mxu0 0.0
    %107 = vmatpush1.msra.mxu0 0.0
    %108 = vmatprep.subr.mxu0 0.0
    %109 = vmatpush1.msra.mxu0 0.0
    %110 = vmatprep.subr.mxu0 0.0
    %111 = vmatpush1.msra.mxu0 0.0
    %112 = vmatprep.subr.mxu0 0.0
    %113 = vmatpush1.msra.mxu0 0.0
    %114 = vmatprep.subr.mxu0 0.0
    %115 = vmatpush1.msra.mxu0 0.0
    %116 = vmatprep.subr.mxu0 0.0
    %117 = vmatpush1.msra.mxu0 0.0
    %118 = vmatprep.subr.mxu0 0.0
    %119 = vmatpush1.msra.mxu0 0.0
    %120 = vmatprep.subr.mxu0 0.0
    %121 = vmatpush1.msra.mxu0 0.0
    %122 = vmatprep.subr.mxu0 0.0
    %123 = vmatpush1.msra.mxu0 0.0
    %124 = vmatprep.subr.mxu0 0.0
    %125 = vmatpush1.msra.mxu0 0.0
    %126 = vmatprep.subr.mxu0 0.0
    %127 = vmatpush1.msra.mxu0 0.0
    %128 = vmatprep.subr.mxu0 0.0
    %129 = vmatpush1.msra.mxu0 0.0
    %130 = vmatprep.subr.mxu0 0.0
    %131 = vmatpush1.msra.mxu0 0.0
    %132 = vmatprep.subr.mxu0 0.0
    %133 = vmatpush1.msra.mxu0 0.0
    %134 = vmatprep.subr.mxu0 0.0
    %135 = vmatpush1.msra.mxu0 0.0
    %136 = vmatprep.subr.mxu0 0.0
    %137 = vmatpush1.msra.mxu0 0.0
    %138 = vmatprep.mubr.f32.mxu0 0.0
    %139 = vmatmul.mubr.f32.gmra.mrb[0].mxu0 %v72
    %v140 = vpop.f32.mrb[0].mxu0
    %v141 = vadd.f32 %v68, %v140
    %v142 = vpop.f32.mrb[0].mxu0
    %143 = vdwg.mxu0
    %v144 = vmax.f32 %v141, 0.0
    %v145 = vld [vmem:[#allocation7] sm:$0xff]
    %v146 = vld [vmem:[#allocation7 + $0x8] sm:$0xff]
    %v147 = vld [vmem:[#allocation7 + $0x10] sm:$0xff]
    %v148 = vld [vmem:[#allocation7 + $0x18] sm:$0xff]
    %v149 = vld [vmem:[#allocation7 + $0x20] sm:$0xff]
    %v150 = vld [vmem:[#allocation7 + $0x28] sm:$0xff]
    %v151 = vld [vmem:[#allocation7 + $0x30] sm:$0xff]
    %v152 = vld [vmem:[#allocation7 + $0x38] sm:$0xff]
    %v153 = vld [vmem:[#allocation7 + $0x40] sm:$0xff]
    %v154 = vld [vmem:[#allocation7 + $0x48] sm:$0xff]
    %v155 = vld [vmem:[#allocation7 + $0x50] sm:$0xff]
    %v156 = vld [vmem:[#allocation7 + $0x58] sm:$0xff]
    %v157 = vld [vmem:[#allocation7 + $0x60] sm:$0xff]
    %v158 = vld [vmem:[#allocation7 + $0x68] sm:$0xff]
    %v159 = vld [vmem:[#allocation7 + $0x70] sm:$0xff]
    %v160 = vld [vmem:[#allocation7 + $0x78] sm:$0xff]
    %v161 = vld [vmem:[%s4] sm:$0x1]
    %v163 = vlaneseq
    %v164 = vshrl.u32 %v163, 7
    %v165 = vsub.s32 0, %v164
    %v166 = vrot.slane %v161, %v165
    %168 = vmatprep.subr.mxu0 0.0
    %169 = vmatpush1.msra.mxu0 %v145
    %170 = vmatprep.subr.mxu0 0.0
    %171 = vmatpush1.msra.mxu0 %v146
    %172 = vmatprep.subr.mxu0 0.0
    %173 = vmatpush1.msra.mxu0 %v147
    %174 = vmatprep.subr.mxu0 0.0
    %175 = vmatpush1.msra.mxu0 %v148
    %176 = vmatprep.subr.mxu0 0.0
    %177 = vmatpush1.msra.mxu0 %v149
    %178 = vmatprep.subr.mxu0 0.0
    %179 = vmatpush1.msra.mxu0 %v150
    %180 = vmatprep.subr.mxu0 0.0
    %181 = vmatpush1.msra.mxu0 %v151
    %182 = vmatprep.subr.mxu0 0.0
    %183 = vmatpush1.msra.mxu0 %v152
    %184 = vmatprep.subr.mxu0 0.0
    %185 = vmatpush1.msra.mxu0 %v153
    %186 = vmatprep.subr.mxu0 0.0
    %187 = vmatpush1.msra.mxu0 %v154
    %188 = vmatprep.subr.mxu0 0.0
    %189 = vmatpush1.msra.mxu0 %v155
    %190 = vmatprep.subr.mxu0 0.0
    %191 = vmatpush1.msra.mxu0 %v156
    %192 = vmatprep.subr.mxu0 0.0
    %193 = vmatpush1.msra.mxu0 %v157
    %194 = vmatprep.subr.mxu0 0.0
    %195 = vmatpush1.msra.mxu0 %v158
    %196 = vmatprep.subr.mxu0 0.0
    %197 = vmatpush1.msra.mxu0 %v159
    %198 = vmatprep.subr.mxu0 0.0
    %199 = vmatpush1.msra.mxu0 %v160
    %200 = vmatprep.subr.mxu0 0.0
    %201 = vmatpush1.msra.mxu0 0.0
    %202 = vmatprep.subr.mxu0 0.0
    %203 = vmatpush1.msra.mxu0 0.0
    %204 = vmatprep.subr.mxu0 0.0
    %205 = vmatpush1.msra.mxu0 0.0
    %206 = vmatprep.subr.mxu0 0.0
    %207 = vmatpush1.msra.mxu0 0.0
    %208 = vmatprep.subr.mxu0 0.0
    %209 = vmatpush1.msra.mxu0 0.0
    %210 = vmatprep.subr.mxu0 0.0
    %211 = vmatpush1.msra.mxu0 0.0
    %212 = vmatprep.subr.mxu0 0.0
    %213 = vmatpush1.msra.mxu0 0.0
    %214 = vmatprep.subr.mxu0 0.0
    %215 = vmatpush1.msra.mxu0 0.0
    %216 = vmatprep.subr.mxu0 0.0
    %217 = vmatpush1.msra.mxu0 0.0
    %218 = vmatprep.subr.mxu0 0.0
    %219 = vmatpush1.msra.mxu0 0.0
    %220 = vmatprep.subr.mxu0 0.0
    %221 = vmatpush1.msra.mxu0 0.0
    %222 = vmatprep.subr.mxu0 0.0
    %223 = vmatpush1.msra.mxu0 0.0
    %224 = vmatprep.subr.mxu0 0.0
    %225 = vmatpush1.msra.mxu0 0.0
    %226 = vmatprep.subr.mxu0 0.0
    %227 = vmatpush1.msra.mxu0 0.0
    %228 = vmatprep.subr.mxu0 0.0
    %229 = vmatpush1.msra.mxu0 0.0
    %230 = vmatprep.subr.mxu0 0.0
    %231 = vmatpush1.msra.mxu0 0.0
    %232 = vmatprep.mubr.f32.mxu0 0.0
    %233 = vmatmul.mubr.f32.gmra.mrb[0].mxu0 %v144
    %v234 = vpop.f32.mrb[0].mxu0
    %v235 = vadd.f32 %v166, %v234
    %v236 = vpop.f32.mrb[0].mxu0
    %237 = vdwg.mxu0
    %v238 = vmax.f32 %v235, 0.0
    %239 = vst [vmem:[#allocation8] sm:$0xff] %v238
    // Predicated region
    $region34: #{tpu_custom_call.1} parent=1 // pred_check
      _
    $region35: #{tpu_custom_call.1} parent=1 // pred_check_branch
      %241 = sbr.rel (0) target = $region37
    $region36: #{tpu_custom_call.1} parent=1 // pred_region
      %s243 = ssub.s32 128, 128
      %244 = vsyncadd [#allocation4], %s243
      %s246 = sshll.u32 [#allocation8], 4
      %s247 = int_to_ptr.vmem [resolvable:$true] %s246
      %249 = dma.vmem_to_hbm [thread:$0]  %s247, 128, %s5, [#allocation4]
    $region37: #{tpu_custom_call.1} parent=1 // pred_fallthru
      _
    // Predicated region
    $region38: #{tpu_custom_call.1} parent=1 // pred_check
      _
    $region39: #{tpu_custom_call.1} parent=1 // pred_check_branch
      %251 = sbr.rel (0) target = $region41
    $region40: #{tpu_custom_call.1} parent=1 // pred_region
      %252 = dma.done [#allocation4], 128
    $region41: #{tpu_custom_call.1} parent=1 // pred_fallthru
      _
    %253 = vsyncpa [#allocation3], 1
    %254 = vsyncpa [#allocation6], 1
    %255 = vsyncpa [#allocation4], 1

</llo_original>
